<compile_context>
chip_gen: v7x
topology: tpu7x:2x2x1
jax: 0.10.0
libtpu: 0.0.40
codegen_flags: <defaults>
</compile_context>

<pallas_src>
import jax
import jax.numpy as jnp
from jax.experimental import pallas as pl
from jax.experimental.pallas import tpu as pltpu


# ---------------------------------------------------------------------------
# Kernels (one row tile of nodes per grid point)
# ---------------------------------------------------------------------------
def _hidden_kernel(adj_ref, invdeg_ref, xfull_ref, xrow_ref, w_ref, sc_ref,
                   sh_ref, o_ref):
    # adj_ref   : (TILE_M, N)  bf16, exact 0/1 adjacency rows (streamed)
    # invdeg_ref: (TILE_M, 1)  f32, 1/deg for these rows
    # xfull_ref : (N, P)       bf16, all node features (resident across grid)
    # xrow_ref  : (TILE_M, P)  bf16, this tile's own rows (root term)
    # w_ref     : (2P, P)      bf16, stacked [W_l; W_r]
    # sc_ref/sh_ref: (1, P)    f32 BatchNorm(eval) affine, lin_l bias folded in
    agg = jnp.dot(adj_ref[...], xfull_ref[...],
                  preferred_element_type=jnp.float32)      # MXU, f32 accumulate
    agg = agg * invdeg_ref[...]                            # exact mean (f32 VPU)
    # Fused lin_l + lin_r: single K=2P MXU contraction.
    both = jnp.concatenate([agg.astype(jnp.bfloat16), xrow_ref[...]], axis=1)
    h = jnp.dot(both, w_ref[...], preferred_element_type=jnp.float32)
    # BatchNorm1d (eval) affine + ReLU, all f32 (v5e-safe VPU path).
    h = h * sc_ref[...] + sh_ref[...]
    o_ref[...] = jnp.maximum(h, 0.0).astype(o_ref.dtype)


def _make_output_kernel(num_classes):
    def kernel(adj_ref, invdeg_ref, xfull_ref, xrow_ref, w_ref, b_ref, o_ref):
        agg = jnp.dot(adj_ref[...], xfull_ref[...],
                      preferred_element_type=jnp.float32)
        agg = agg * invdeg_ref[...]
        both = jnp.concatenate([agg.astype(jnp.bfloat16), xrow_ref[...]], axis=1)
        h = jnp.dot(both, w_ref[...], preferred_element_type=jnp.float32)
        h = h + b_ref[...]
        # Mask padded class columns (safe: h is f32 here), stable log_softmax.
        col = jax.lax.broadcasted_iota(jnp.int32, h.shape, 1)
        h = jnp.where(col < num_classes, h, -1e30)
        m = jnp.max(h, axis=-1, keepdims=True)
        z = h - m
        lse = jnp.log(jnp.sum(jnp.exp(z), axis=-1, keepdims=True))
        o_ref[...] = z - lse
    return kernel


# ---------------------------------------------------------------------------
# Wrapper: per-layer pallas_calls with a "parallel" row grid
# ---------------------------------------------------------------------------
def _pick_tile_m(n):
    # 256-wide row tiles better fill the 2x256x256 MXU on v6e/v7x; keep 128 at
    # small N (and on v5e, whose MXU is 4x128x128).
    if n >= 512 and n % 256 == 0:
        return 256
    return 128


def sage_forward(padded_params, x_pad, adj_bin, inv_deg, num_classes,
                 tile_m=None):
    N, P = x_pad.shape
    assert adj_bin.shape == (N, N) and inv_deg.shape == (N, 1)
    if tile_m is None:
        tile_m = _pick_tile_m(N)
    assert N % tile_m == 0 and P % 128 == 0
    grid = (N // tile_m,)
    n_hidden = len(padded_params) - 1

    def common_specs():
        return [
            pl.BlockSpec((tile_m, N), lambda i: (i, 0)),   # adj rows (streamed)
            pl.BlockSpec((tile_m, 1), lambda i: (i, 0)),   # 1/deg rows
            pl.BlockSpec((N, P), lambda i: (0, 0)),        # x full (resident)
            pl.BlockSpec((tile_m, P), lambda i: (i, 0)),   # x rows (root term)
            pl.BlockSpec((2 * P, P), lambda i: (0, 0)),    # stacked [W_l; W_r]
        ]

    def vmem_and_cost(n_affine_vecs, out_itemsize):
        # Double-buffered block footprint + headroom (explicit budget: v7x has
        # only 64 MiB physical VMEM, 32 MiB scoped by default).
        blk_bytes = (tile_m * N * 2 + tile_m * 4 + N * P * 2 + tile_m * P * 2
                     + 2 * P * P * 2 + n_affine_vecs * P * 4
                     + tile_m * P * out_itemsize)
        vmem = int(min(max(2 * blk_bytes + (8 << 20), 32 << 20), 96 << 20))
        flops = 2 * N * N * P + 2 * N * (2 * P) * P      # padded-dim FLOPs
        nbytes = (N * N * 2 + N * 4 + 2 * N * P * 2 + 2 * P * P * 2
                  + n_affine_vecs * P * 4 + N * P * out_itemsize)
        return vmem, flops, nbytes

    x = x_pad
    for li in range(n_hidden):
        layer = padded_params[li]
        vmem, flops, nbytes = vmem_and_cost(2, 2)
        x = pl.pallas_call(
            _hidden_kernel,
            out_shape=jax.ShapeDtypeStruct((N, P), jnp.bfloat16),
            grid=grid,
            in_specs=common_specs() + [
                pl.BlockSpec((1, P), lambda i: (0, 0)),    # BN scale
                pl.BlockSpec((1, P), lambda i: (0, 0)),    # BN shift (+bias)
            ],
            out_specs=pl.BlockSpec((tile_m, P), lambda i: (i, 0)),
            compiler_params=pltpu.CompilerParams(
                dimension_semantics=("parallel",),
                vmem_limit_bytes=vmem),
            cost_estimate=pl.CostEstimate(
                flops=flops, transcendentals=0, bytes_accessed=nbytes),
        )(adj_bin, inv_deg, x, x, layer["w"], layer["bn_scale"],
          layer["bn_shift"])

    last = padded_params[-1]
    vmem, flops, nbytes = vmem_and_cost(1, 4)
    out_padded = pl.pallas_call(
        _make_output_kernel(num_classes),
        out_shape=jax.ShapeDtypeStruct((N, P), jnp.float32),
        grid=grid,
        in_specs=common_specs() + [
            pl.BlockSpec((1, P), lambda i: (0, 0)),        # output bias
        ],
        out_specs=pl.BlockSpec((tile_m, P), lambda i: (i, 0)),
        compiler_params=pltpu.CompilerParams(
            dimension_semantics=("parallel",),
            vmem_limit_bytes=vmem),
        cost_estimate=pl.CostEstimate(
            flops=flops, transcendentals=N * (P + 1), bytes_accessed=nbytes),
    )(adj_bin, inv_deg, x, x, last["w"], last["b"])

    # Drop padded class columns outside the kernel (cheap XLA slice).
    return out_padded[:, :num_classes]


# ---------------------------------------------------------------------------
# Parameter construction (deterministic, synthetic).
# Returns (padded bf16 params for the kernel, raw f32 params for the reference)
# ---------------------------------------------------------------------------
def init_sage_params(key, in_channels, hidden, out_channels, num_layers, pad):
    dims = [in_channels] + [hidden] * (num_layers - 1) + [out_channels]
    assert max(dims) <= pad and pad % 128 == 0
    eps = 1e-5
    padded, raw = [], []
    for li in range(num_layers):
        fin, fout = dims[li], dims[li + 1]
        k1, k2, k3, key = jax.random.split(key, 4)
        scale = 1.0 / jnp.sqrt(jnp.float32(fin))
        w_l = jax.random.uniform(k1, (fin, fout), jnp.float32, -scale, scale)
        w_r = jax.random.uniform(k2, (fin, fout), jnp.float32, -scale, scale)
        b_l = jax.random.uniform(k3, (1, fout), jnp.float32, -scale, scale)
        raw.append({"w_l": w_l, "w_r": w_r, "b_l": b_l})

        wl_pad = jnp.pad(w_l, ((0, pad - fin), (0, pad - fout)))
        wr_pad = jnp.pad(w_r, ((0, pad - fin), (0, pad - fout)))
        # Stacked [W_l; W_r] -> single K=2*pad MXU contraction in the kernel.
        layer = {"w": jnp.concatenate([wl_pad, wr_pad], axis=0).astype(jnp.bfloat16)}
        if li < num_layers - 1:
            # BatchNorm1d fresh init (eval): gamma=1, beta=0, mean=0, var=1.
            gamma = jnp.ones((1, fout), jnp.float32)
            beta = jnp.zeros((1, fout), jnp.float32)
            rmean = jnp.zeros((1, fout), jnp.float32)
            rvar = jnp.ones((1, fout), jnp.float32)
            bn_scale = gamma / jnp.sqrt(rvar + eps)
            bn_shift = beta - rmean * bn_scale
            # Fold lin_l bias into BN shift: (h + b)*s + t = h*s + (t + b*s).
            bn_shift = bn_shift + b_l * bn_scale
            layer["bn_scale"] = jnp.pad(bn_scale, ((0, 0), (0, pad - fout)))
            layer["bn_shift"] = jnp.pad(bn_shift, ((0, 0), (0, pad - fout)))
        else:
            layer["b"] = jnp.pad(b_l, ((0, 0), (0, pad - fout)))
        padded.append(layer)
    return padded, raw


# Pure-JAX f32 reference (exact module semantics, eval mode).
def sage_reference(raw_params, x, adj_norm):
    eps = 1e-5
    bn_scale = 1.0 / jnp.sqrt(1.0 + eps)   # gamma=1, var=1, mean=0, beta=0
    h = x
    n = len(raw_params)
    for li, p in enumerate(raw_params):
        agg = adj_norm @ h
        out = agg @ p["w_l"] + p["b_l"] + h @ p["w_r"]
        if li < n - 1:
            out = out * bn_scale
            out = jnp.maximum(out, 0.0)
        h = out
    return jax.nn.log_softmax(h, axis=-1)


if __name__ == "__main__":
    key = jax.random.PRNGKey(0)

    # Small, TPU-friendly shapes (N=256 -> 2-point "parallel" row grid).
    N = 256            # number of nodes
    in_channels = 16
    hidden = 32
    out_channels = 8
    num_layers = 3
    dropout = 0.5      # eval mode -> no-op
    PAD = 128          # lane-dense padded feature width

    k_feat, k_adj, k_param = jax.random.split(key, 3)

    # Node features [N, in_channels].
    x = jax.random.normal(k_feat, (N, in_channels), jnp.float32)

    # Random sparse-ish binary adjacency; keep it exact 0/1 for the kernel and
    # factor the mean-normalization into a separate f32 1/deg vector.
    adj = (jax.random.uniform(k_adj, (N, N)) < 0.05).astype(jnp.float32)
    deg = jnp.maximum(adj.sum(axis=1, keepdims=True), 1.0)
    inv_deg = (1.0 / deg).astype(jnp.float32)      # (N, 1) f32
    adj_bin = adj.astype(jnp.bfloat16)             # 0/1 values exact in bf16
    adj_norm = adj / deg                           # f32, reference only

    padded_params, raw_params = init_sage_params(
        k_param, in_channels, hidden, out_channels, num_layers, PAD)

    x_pad = jnp.pad(x, ((0, 0), (0, PAD - in_channels))).astype(jnp.bfloat16)

    out = sage_forward(padded_params, x_pad, adj_bin, inv_deg, out_channels)
    out = jax.block_until_ready(out)

    assert out.shape == (N, out_channels)
    # log_softmax rows should sum to ~1 after exp.
    row_sums = jnp.exp(out).sum(axis=-1)
    assert bool(jnp.all(jnp.abs(row_sums - 1.0) < 1e-3))

    # Compare against f32 pure-JAX reference (bf16 matmul operands => loose tol).
    ref = sage_reference(raw_params, x, adj_norm)
    max_err = float(jnp.max(jnp.abs(out - ref)))
    assert max_err < 0.1, f"max abs err vs reference: {max_err}"

    print("KERNEL_OK")
</pallas_src>

<mosaic_0001>
module attributes {stable_mosaic.version = 11 : i64} {
  func.func @_hidden_kernel(%arg0: i32, %arg1: memref<128x256xbf16, #tpu.memory_space<vmem>>, %arg2: memref<128x1xf32, #tpu.memory_space<vmem>>, %arg3: memref<256x128xbf16, #tpu.memory_space<vmem>>, %arg4: memref<128x128xbf16, #tpu.memory_space<vmem>>, %arg5: memref<256x128xbf16, #tpu.memory_space<vmem>>, %arg6: memref<1x128xf32, #tpu.memory_space<vmem>>, %arg7: memref<1x128xf32, #tpu.memory_space<vmem>>, %arg8: memref<128x128xbf16, #tpu.memory_space<vmem>>) attributes {dimension_semantics = [#tpu.dimension_semantics<parallel>], iteration_bounds = array<i64: 2>, scalar_prefetch = 0 : i64, scratch_operands = 0 : i64, tpu.core_type = #tpu.core_type<tc>, window_params = [{transform_indices = @transform_0, window_bounds = array<i64: 128, 256>}, {transform_indices = @transform_1, window_bounds = array<i64: 128, 1>}, {pipeline_mode = #tpu.pipeline_mode<synchronous>, transform_indices = @transform_2, window_bounds = array<i64: 256, 128>}, {transform_indices = @transform_3, window_bounds = array<i64: 128, 128>}, {pipeline_mode = #tpu.pipeline_mode<synchronous>, transform_indices = @transform_4, window_bounds = array<i64: 256, 128>}, {pipeline_mode = #tpu.pipeline_mode<synchronous>, transform_indices = @transform_5, window_bounds = array<i64: 1, 128>}, {pipeline_mode = #tpu.pipeline_mode<synchronous>, transform_indices = @transform_6, window_bounds = array<i64: 1, 128>}, {transform_indices = @transform_7, window_bounds = array<i64: 128, 128>}]} {
    %c0 = arith.constant 0 : index
    %c0_0 = arith.constant 0 : index
    %0 = vector.load %arg1[%c0, %c0_0] : memref<128x256xbf16, #tpu.memory_space<vmem>>, vector<128x256xbf16>
    %c0_1 = arith.constant 0 : index
    %c0_2 = arith.constant 0 : index
    %1 = vector.load %arg3[%c0_1, %c0_2] : memref<256x128xbf16, #tpu.memory_space<vmem>>, vector<256x128xbf16>
    %cst = arith.constant dense<0.000000e+00> : vector<128x128xf32>
    %2 = tpu.matmul %0, %1, %cst {dimension_numbers = #tpu.dot_dimension_numbers<[1], [0], [0], [1], [0, 0, 1, 1], [], []>} : vector<128x256xbf16>, vector<256x128xbf16>, vector<128x128xf32> -> vector<128x128xf32>
    %c0_3 = arith.constant 0 : index
    %c0_4 = arith.constant 0 : index
    %3 = vector.load %arg2[%c0_3, %c0_4] : memref<128x1xf32, #tpu.memory_space<vmem>>, vector<128x1xf32>
    %4 = vector.broadcast %3 : vector<128x1xf32> to vector<128x128xf32>
    %5 = arith.mulf %2, %4 : vector<128x128xf32>
    %6 = arith.truncf %5 : vector<128x128xf32> to vector<128x128xbf16>
    %c0_5 = arith.constant 0 : index
    %c0_6 = arith.constant 0 : index
    %7 = vector.load %arg4[%c0_5, %c0_6] : memref<128x128xbf16, #tpu.memory_space<vmem>>, vector<128x128xbf16>
    %8 = tpu.concatenate %6, %7 in 1 : vector<128x128xbf16>, vector<128x128xbf16> -> vector<128x256xbf16>
    %c0_7 = arith.constant 0 : index
    %c0_8 = arith.constant 0 : index
    %9 = vector.load %arg5[%c0_7, %c0_8] : memref<256x128xbf16, #tpu.memory_space<vmem>>, vector<256x128xbf16>
    %cst_9 = arith.constant dense<0.000000e+00> : vector<128x128xf32>
    %10 = tpu.matmul %8, %9, %cst_9 {dimension_numbers = #tpu.dot_dimension_numbers<[1], [0], [0], [1], [0, 0, 1, 1], [], []>} : vector<128x256xbf16>, vector<256x128xbf16>, vector<128x128xf32> -> vector<128x128xf32>
    %c0_10 = arith.constant 0 : index
    %c0_11 = arith.constant 0 : index
    %11 = vector.load %arg6[%c0_10, %c0_11] : memref<1x128xf32, #tpu.memory_space<vmem>>, vector<1x128xf32>
    %12 = vector.broadcast %11 : vector<1x128xf32> to vector<128x128xf32>
    %13 = arith.mulf %10, %12 : vector<128x128xf32>
    %c0_12 = arith.constant 0 : index
    %c0_13 = arith.constant 0 : index
    %14 = vector.load %arg7[%c0_12, %c0_13] : memref<1x128xf32, #tpu.memory_space<vmem>>, vector<1x128xf32>
    %15 = vector.broadcast %14 : vector<1x128xf32> to vector<128x128xf32>
    %16 = arith.addf %13, %15 : vector<128x128xf32>
    %cst_14 = arith.constant 0.000000e+00 : f32
    %17 = vector.broadcast %cst_14 : f32 to vector<128x128xf32>
    %18 = arith.maximumf %16, %17 : vector<128x128xf32>
    %19 = arith.truncf %18 : vector<128x128xf32> to vector<128x128xbf16>
    %c0_15 = arith.constant 0 : index
    %c0_16 = arith.constant 0 : index
    %20 = vector.load %arg8[%c0_15, %c0_16] : memref<128x128xbf16, #tpu.memory_space<vmem>>, vector<128x128xbf16>
    tpu.vector_store %arg8[%c0_15, %c0_16], %19 {strides = array<i32>} : memref<128x128xbf16, #tpu.memory_space<vmem>>, vector<128x128xbf16>,
    return
  }
  func.func @transform_0(%arg0: i32) -> (i32, i32) {
    %c0_i32 = arith.constant 0 : i32
    %c0_i32_0 = arith.constant 0 : i32
    return %arg0, %c0_i32 : i32, i32
  }
  func.func @transform_1(%arg0: i32) -> (i32, i32) {
    %c0_i32 = arith.constant 0 : i32
    %c0_i32_0 = arith.constant 0 : i32
    return %arg0, %c0_i32 : i32, i32
  }
  func.func @transform_2(%arg0: i32) -> (i32, i32) {
    %c0_i32 = arith.constant 0 : i32
    %c0_i32_0 = arith.constant 0 : i32
    %c0_i32_1 = arith.constant 0 : i32
    return %c0_i32, %c0_i32_0 : i32, i32
  }
  func.func @transform_3(%arg0: i32) -> (i32, i32) {
    %c0_i32 = arith.constant 0 : i32
    %c0_i32_0 = arith.constant 0 : i32
    return %arg0, %c0_i32 : i32, i32
  }
  func.func @transform_4(%arg0: i32) -> (i32, i32) {
    %c0_i32 = arith.constant 0 : i32
    %c0_i32_0 = arith.constant 0 : i32
    %c0_i32_1 = arith.constant 0 : i32
    return %c0_i32, %c0_i32_0 : i32, i32
  }
  func.func @transform_5(%arg0: i32) -> (i32, i32) {
    %c0_i32 = arith.constant 0 : i32
    %c0_i32_0 = arith.constant 0 : i32
    %c0_i32_1 = arith.constant 0 : i32
    return %c0_i32, %c0_i32_0 : i32, i32
  }
  func.func @transform_6(%arg0: i32) -> (i32, i32) {
    %c0_i32 = arith.constant 0 : i32
    %c0_i32_0 = arith.constant 0 : i32
    %c0_i32_1 = arith.constant 0 : i32
    return %c0_i32, %c0_i32_0 : i32, i32
  }
  func.func @transform_7(%arg0: i32) -> (i32, i32) {
    %c0_i32 = arith.constant 0 : i32
    %c0_i32_0 = arith.constant 0 : i32
    return %arg0, %c0_i32 : i32, i32
  }
}

</mosaic_0001>

<llo_original>
// kernel: tpu_custom_call.1
$region0: #{tpu_custom_call.1}
  #allocation0 [shape = 'u32[]', space=smem, size = 0x4, offset = 0x4, fixed_abs, tag = 'smem constant byte address 0x4 - core index']
  #allocation1 [shape = 'u32[144,128]{1,0:T(1,128)}', space=vmem, size = 0x12000, scoped, tag = 'internal scratch']
  %s0 = inlined_call_operand.vmem [shape: bf16[256,256], index: 0, kind: input, shape index: {}]
  %s1 = inlined_call_operand.vmem [shape: f32[256,1], index: 1, kind: input, shape index: {}]
  %s2 = inlined_call_operand.hbm [shape: bf16[256,128], index: 2, kind: input, shape index: {}]
  %s3 = inlined_call_operand.hbm [shape: bf16[256,128], index: 3, kind: input, shape index: {}]
  %s4 = inlined_call_operand.hbm [shape: bf16[256,128], index: 4, kind: input, shape index: {}]
  %s5 = inlined_call_operand.vmem [shape: f32[1,128], index: 5, kind: input, shape index: {}]
  %s6 = inlined_call_operand.vmem [shape: f32[1,128], index: 6, kind: input, shape index: {}]
  %s7 = inlined_call_operand.hbm [shape: bf16[256,128], index: 7, kind: output, shape index: {}]
  %s8 = sld [smem:[#allocation0]]
  $region73: #{tpu_custom_call.1} parent=0
    _
  %s10 = ssub.s32 1, %s8
  %s11 = scalar_select 0, %s10, %s8
  $region1: #{tpu_custom_call.1} parent=0
    #allocation2 [shape = 'u8[65536]{0}', space=vmem, size = 0x10000, scoped, tag = 'input window, operand 2, single buffered']
    #allocation3 [shape = 's32[2]{0}', space=sflag, size = 0x8, scoped, tag = 'scoped memory for tpu_custom_call.1']
    #allocation4 [shape = 's32[2]{0}', space=sflag, size = 0x8, scoped, tag = 'scoped memory for tpu_custom_call.1']
    #allocation5 [shape = 'u8[65536]{0}', space=vmem, size = 0x10000, scoped, tag = 'input window, operand 3']
    #allocation6 [shape = 's32[2]{0}', space=sflag, size = 0x8, scoped, tag = 'scoped memory for tpu_custom_call.1']
    #allocation7 [shape = 'u8[65536]{0}', space=vmem, size = 0x10000, scoped, tag = 'input window, operand 4, single buffered']
    #allocation8 [shape = 'u8[65536]{0}', space=vmem, size = 0x10000, scoped, tag = 'output window, operand 0']
    %12 = vsyncpa [#allocation3], 0
    %13 = vsyncpa [#allocation6], 0
    %s14 = scalar_lea.sflag [#allocation6], 1
    %15 = vsyncpa %s14, 0
    %16 = vsyncpa [#allocation4], 0
    %s17 = scalar_lea.sflag [#allocation4], 1
    %18 = vsyncpa %s17, 0
    loop: start=0, step=1, limit=4
    $region2: #{tpu_custom_call.1} parent=1 // loop_pre_header
      _
    $region3: #{tpu_custom_call.1} parent=1 // loop_header
      %s20 = sphi 0, %s24
      %p21 = scmp.ge.s32.totalorder %s20, 4
      %s30 = sphi 0, %s32
      %s33 = sphi 0, %s30
      %s34 = sphi 0, %s33
      %s50 = sphi 0, %s34
      %s56 = sphi 0, %s58
      %s59 = sphi 0, %s56
      %s60 = sphi 0, %s59
      %s76 = sphi 0, %s60
      %s80 = sphi 0, %s80
      %s82 = sphi 0, %s80
      %s83 = sphi 0, %s82
      %s97 = sphi 0, %s83
      %s103 = sphi 0, %s105
      %s106 = sphi 0, %s103
      %s107 = sphi 0, %s106
      %s123 = sphi 0, %s107
      %s127 = sphi 0, %s127
      %s129 = sphi 0, %s127
      %s130 = sphi 0, %s129
      %s144 = sphi 0, %s130
      %s148 = sphi 0, %s148
      %s150 = sphi 0, %s148
      %s151 = sphi 0, %s150
      %s165 = sphi 0, %s151
      %s169 = sphi 0, %s169
      %s171 = sphi 0, %s169
      %s172 = sphi 0, %s171
      %s186 = sphi 0, %s172
      %s192 = sphi 0, %s194
      %s195 = sphi 0, %s192
      %s196 = sphi 0, %s195
      %s212 = sphi 0, %s196
    $region4: #{tpu_custom_call.1} parent=1 // loop_header_branch
      %23 = sbr.rel (%p21) target = $region8
    $region5: #{tpu_custom_call.1} parent=1 // loop_body
      %s25 = ssub.s32 %s20, 1
      %s26 = ssub.s32 %s20, 2
      %s27 = sadd.s32 %s20, 1
      %s28 = ssub.s32 %s20, %s27
      %p29 = scmp.eq.s32.totalorder %s28, 0
      %s31 = sadd.s32 %s30, 1
      %s32 = scalar_select %p29, %s30, %s31
      %p35 = pneg %p29
      %p36 = scmp.eq.s32.totalorder %s20, 1
      %p37 = por %p35, %p36
      %p38 = scmp.ne.s32.totalorder %s30, %s33
      %p39 = scmp.eq.s32.totalorder %s20, 0
      %p40 = por %p38, %p39
      %p41 = scmp.ne.s32.totalorder %s30, %s33
      %p42 = scmp.eq.s32.totalorder %s25, 1
      %p43 = por %p41, %p42
      %p44 = scmp.ne.s32.totalorder %s33, %s34
      %p45 = scmp.eq.s32.totalorder %s25, 0
      %p46 = por %p44, %p45
      %p47 = scmp.ne.s32.totalorder %s33, %s34
      %p48 = scmp.eq.s32.totalorder %s26, 1
      %p49 = por %p47, %p48
      %p51 = scmp.ne.s32.totalorder %s34, %s50
      %p52 = scmp.eq.s32.totalorder %s26, 0
      %p53 = por %p51, %p52
      %s54 = ssub.s32 %s20, %s27
      %p55 = scmp.eq.s32.totalorder %s54, 0
      %s57 = sadd.s32 %s56, 1
      %s58 = scalar_select %p55, %s56, %s57
      %p61 = pneg %p55
      %p62 = scmp.eq.s32.totalorder %s20, 1
      %p63 = por %p61, %p62
      %p64 = scmp.ne.s32.totalorder %s56, %s59
      %p65 = scmp.eq.s32.totalorder %s20, 0
      %p66 = por %p64, %p65
      %p67 = scmp.ne.s32.totalorder %s56, %s59
      %p68 = scmp.eq.s32.totalorder %s25, 1
      %p69 = por %p67, %p68
      %p70 = scmp.ne.s32.totalorder %s59, %s60
      %p71 = scmp.eq.s32.totalorder %s25, 0
      %p72 = por %p70, %p71
      %p73 = scmp.ne.s32.totalorder %s59, %s60
      %p74 = scmp.eq.s32.totalorder %s26, 1
      %p75 = por %p73, %p74
      %p77 = scmp.ne.s32.totalorder %s60, %s76
      %p78 = scmp.eq.s32.totalorder %s26, 0
      %p79 = por %p77, %p78
      %s81 = sadd.s32 %s80, 1
      %p84 = scmp.eq.s32.totalorder %s20, 1
      %p85 = scmp.ne.s32.totalorder %s80, %s82
      %p86 = scmp.eq.s32.totalorder %s20, 0
      %p87 = por %p85, %p86
      %p88 = scmp.ne.s32.totalorder %s80, %s82
      %p89 = scmp.eq.s32.totalorder %s25, 1
      %p90 = por %p88, %p89
      %p91 = scmp.ne.s32.totalorder %s82, %s83
      %p92 = scmp.eq.s32.totalorder %s25, 0
      %p93 = por %p91, %p92
      %p94 = scmp.ne.s32.totalorder %s82, %s83
      %p95 = scmp.eq.s32.totalorder %s26, 1
      %p96 = por %p94, %p95
      %p98 = scmp.ne.s32.totalorder %s83, %s97
      %p99 = scmp.eq.s32.totalorder %s26, 0
      %p100 = por %p98, %p99
      %s101 = ssub.s32 %s20, %s27
      %p102 = scmp.eq.s32.totalorder %s101, 0
      %s104 = sadd.s32 %s103, 1
      %s105 = scalar_select %p102, %s103, %s104
      %p108 = pneg %p102
      %p109 = scmp.eq.s32.totalorder %s20, 1
      %p110 = por %p108, %p109
      %p111 = scmp.ne.s32.totalorder %s103, %s106
      %p112 = scmp.eq.s32.totalorder %s20, 0
      %p113 = por %p111, %p112
      %p114 = scmp.ne.s32.totalorder %s103, %s106
      %p115 = scmp.eq.s32.totalorder %s25, 1
      %p116 = por %p114, %p115
      %p117 = scmp.ne.s32.totalorder %s106, %s107
      %p118 = scmp.eq.s32.totalorder %s25, 0
      %p119 = por %p117, %p118
      %p120 = scmp.ne.s32.totalorder %s106, %s107
      %p121 = scmp.eq.s32.totalorder %s26, 1
      %p122 = por %p120, %p121
      %p124 = scmp.ne.s32.totalorder %s107, %s123
      %p125 = scmp.eq.s32.totalorder %s26, 0
      %p126 = por %p124, %p125
      %s128 = sadd.s32 %s127, 1
      %p131 = scmp.eq.s32.totalorder %s20, 1
      %p132 = scmp.ne.s32.totalorder %s127, %s129
      %p133 = scmp.eq.s32.totalorder %s20, 0
      %p134 = por %p132, %p133
      %p135 = scmp.ne.s32.totalorder %s127, %s129
      %p136 = scmp.eq.s32.totalorder %s25, 1
      %p137 = por %p135, %p136
      %p138 = scmp.ne.s32.totalorder %s129, %s130
      %p139 = scmp.eq.s32.totalorder %s25, 0
      %p140 = por %p138, %p139
      %p141 = scmp.ne.s32.totalorder %s129, %s130
      %p142 = scmp.eq.s32.totalorder %s26, 1
      %p143 = por %p141, %p142
      %p145 = scmp.ne.s32.totalorder %s130, %s144
      %p146 = scmp.eq.s32.totalorder %s26, 0
      %p147 = por %p145, %p146
      %s149 = sadd.s32 %s148, 1
      %p152 = scmp.eq.s32.totalorder %s20, 1
      %p153 = scmp.ne.s32.totalorder %s148, %s150
      %p154 = scmp.eq.s32.totalorder %s20, 0
      %p155 = por %p153, %p154
      %p156 = scmp.ne.s32.totalorder %s148, %s150
      %p157 = scmp.eq.s32.totalorder %s25, 1
      %p158 = por %p156, %p157
      %p159 = scmp.ne.s32.totalorder %s150, %s151
      %p160 = scmp.eq.s32.totalorder %s25, 0
      %p161 = por %p159, %p160
      %p162 = scmp.ne.s32.totalorder %s150, %s151
      %p163 = scmp.eq.s32.totalorder %s26, 1
      %p164 = por %p162, %p163
      %p166 = scmp.ne.s32.totalorder %s151, %s165
      %p167 = scmp.eq.s32.totalorder %s26, 0
      %p168 = por %p166, %p167
      %s170 = sadd.s32 %s169, 1
      %p173 = scmp.eq.s32.totalorder %s20, 1
      %p174 = scmp.ne.s32.totalorder %s169, %s171
      %p175 = scmp.eq.s32.totalorder %s20, 0
      %p176 = por %p174, %p175
      %p177 = scmp.ne.s32.totalorder %s169, %s171
      %p178 = scmp.eq.s32.totalorder %s25, 1
      %p179 = por %p177, %p178
      %p180 = scmp.ne.s32.totalorder %s171, %s172
      %p181 = scmp.eq.s32.totalorder %s25, 0
      %p182 = por %p180, %p181
      %p183 = scmp.ne.s32.totalorder %s171, %s172
      %p184 = scmp.eq.s32.totalorder %s26, 1
      %p185 = por %p183, %p184
      %p187 = scmp.ne.s32.totalorder %s172, %s186
      %p188 = scmp.eq.s32.totalorder %s26, 0
      %p189 = por %p187, %p188
      %s190 = ssub.s32 %s20, %s27
      %p191 = scmp.eq.s32.totalorder %s190, 0
      %s193 = sadd.s32 %s192, 1
      %s194 = scalar_select %p191, %s192, %s193
      %p197 = pneg %p191
      %p198 = scmp.eq.s32.totalorder %s20, 1
      %p199 = por %p197, %p198
      %p200 = scmp.ne.s32.totalorder %s192, %s195
      %p201 = scmp.eq.s32.totalorder %s20, 0
      %p202 = por %p200, %p201
      %p203 = scmp.ne.s32.totalorder %s192, %s195
      %p204 = scmp.eq.s32.totalorder %s25, 1
      %p205 = por %p203, %p204
      %p206 = scmp.ne.s32.totalorder %s195, %s196
      %p207 = scmp.eq.s32.totalorder %s25, 0
      %p208 = por %p206, %p207
      %p209 = scmp.ne.s32.totalorder %s195, %s196
      %p210 = scmp.eq.s32.totalorder %s26, 1
      %p211 = por %p209, %p210
      %p213 = scmp.ne.s32.totalorder %s196, %s212
      %p214 = scmp.eq.s32.totalorder %s26, 0
      %p215 = por %p213, %p214
      %p216 = scmp.le.s32.totalorder 1, %s20
      %p217 = scmp.lt.s32.totalorder %s20, 3
      %p218 = pnand %p216, %p217
      %p219 = pneg %p218
      // Predicated region
      $region9: #{tpu_custom_call.1} parent=5 // pred_check
        _
      $region10: #{tpu_custom_call.1} parent=5 // pred_check_branch
        %221 = sbr.rel (%p218) target = $region12
      $region11: #{tpu_custom_call.1} parent=5 // pred_region
        %s222 = ssub.s32 %s20, 1
        // Predicated region
        $region13: #{tpu_custom_call.1} parent=11 // pred_check
          %p223 = pneg %p93
        $region14: #{tpu_custom_call.1} parent=11 // pred_check_branch
          %225 = sbr.rel (%p223) target = $region16
        $region15: #{tpu_custom_call.1} parent=11 // pred_region
          %s227 = ssub.s32 2048, 2048
          %228 = vsyncadd [#allocation3], %s227
          %s229 = sshll.u32 [#allocation2], 4
          %s230 = int_to_ptr.vmem [resolvable:$true] %s229
          %235 = dma.hbm_to_vmem [thread:$0]  %s2, 2048, %s230, [#allocation3], 64, 64, 4
        $region16: #{tpu_custom_call.1} parent=11 // pred_fallthru
          _
        // Predicated region
        $region17: #{tpu_custom_call.1} parent=11 // pred_check
          %p236 = pneg %p140
        $region18: #{tpu_custom_call.1} parent=11 // pred_check_branch
          %238 = sbr.rel (%p236) target = $region20
        $region19: #{tpu_custom_call.1} parent=11 // pred_region
          %s240 = ssub.s32 2048, 2048
          %241 = vsyncadd [#allocation6], %s240
          %s242 = sshll.u32 [#allocation7], 4
          %s243 = int_to_ptr.vmem [resolvable:$true] %s242
          %248 = dma.hbm_to_vmem [thread:$0]  %s4, 2048, %s243, [#allocation6], 64, 64, 4
        $region20: #{tpu_custom_call.1} parent=11 // pred_fallthru
          _
        // Predicated region
        $region21: #{tpu_custom_call.1} parent=11 // pred_check
          %p249 = pneg %p161
        $region22: #{tpu_custom_call.1} parent=11 // pred_check_branch
          %251 = sbr.rel (%p249) target = $region24
        $region23: #{tpu_custom_call.1} parent=11 // pred_region
          _
        $region24: #{tpu_custom_call.1} parent=11 // pred_fallthru
          _
        // Predicated region
        $region25: #{tpu_custom_call.1} parent=11 // pred_check
          %p252 = pneg %p182
        $region26: #{tpu_custom_call.1} parent=11 // pred_check_branch
          %254 = sbr.rel (%p252) target = $region28
        $region27: #{tpu_custom_call.1} parent=11 // pred_region
          _
        $region28: #{tpu_custom_call.1} parent=11 // pred_fallthru
          _
      $region12: #{tpu_custom_call.1} parent=5 // pred_fallthru
        _
      %p255 = scmp.lt.s32.totalorder %s20, 2
      // Predicated region
      $region29: #{tpu_custom_call.1} parent=5 // pred_check
        %p256 = pneg %p255
      $region30: #{tpu_custom_call.1} parent=5 // pred_check_branch
        %258 = sbr.rel (%p256) target = $region32
      $region31: #{tpu_custom_call.1} parent=5 // pred_region
        // Predicated region
        $region33: #{tpu_custom_call.1} parent=31 // pred_check
          %p259 = pneg %p40
        $region34: #{tpu_custom_call.1} parent=31 // pred_check_branch
          %261 = sbr.rel (%p259) target = $region36
        $region35: #{tpu_custom_call.1} parent=31 // pred_region
          %s262 = smul.u32 16, %s20
          %p263 = scmp.lt.s32.totalorder %s262, 31
          %s264 = scalar_select %p263, %s262, 31
          %s265 = smul.addr %s264, 2
          %s266 = smul.addr %s265, 4
          %s267 = scalar_lea.vmem %s0, %s266
          %s268 = smul.u32 16, %s20
        $region36: #{tpu_custom_call.1} parent=31 // pred_fallthru
          _
        // Predicated region
        $region37: #{tpu_custom_call.1} parent=31 // pred_check
          %p269 = pneg %p66
        $region38: #{tpu_custom_call.1} parent=31 // pred_check_branch
          %271 = sbr.rel (%p269) target = $region40
        $region39: #{tpu_custom_call.1} parent=31 // pred_region
          %s272 = smul.u32 16, %s20
          %p273 = scmp.lt.s32.totalorder %s272, 31
          %s274 = scalar_select %p273, %s272, 31
          %s275 = smul.addr %s274, 8
          %s276 = scalar_lea.vmem %s1, %s275
          %s277 = smul.u32 16, %s20
        $region40: #{tpu_custom_call.1} parent=31 // pred_fallthru
          _
        // Predicated region
        $region41: #{tpu_custom_call.1} parent=31 // pred_check
          %p278 = pneg %p113
        $region42: #{tpu_custom_call.1} parent=31 // pred_check_branch
          %280 = sbr.rel (%p278) target = $region44
        $region43: #{tpu_custom_call.1} parent=31 // pred_region
          %s281 = sand.u32 %s20, 1
          %s282 = scalar_lea.sflag [#allocation6], %s281
          %s283 = sand.u32 %s103, 1
          %s284 = smul.addr %s283, 64
          %s285 = scalar_lea.vmem [#allocation5], %s284
          %s286 = smul.u32 16, %s20
          %s288 = ssub.s32 1024, 1024
          %289 = vsyncadd %s282, %s288
          %s290 = smul.addr %s286, 64
          %s291 = scalar_lea.hbm %s3, %s290
          %s292 = sshll.u32 %s285, 4
          %s293 = int_to_ptr.vmem [resolvable:$true] %s292
          %298 = dma.hbm_to_vmem [thread:$0]  %s291, 1024, %s293, %s282, 64, 64, 4
        $region44: #{tpu_custom_call.1} parent=31 // pred_fallthru
          _
      $region32: #{tpu_custom_call.1} parent=5 // pred_fallthru
        _
      %p299 = scmp.le.s32.totalorder 1, %s20
      %p300 = scmp.lt.s32.totalorder %s20, 3
      %p301 = pnand %p299, %p300
      %p302 = pneg %p301
      // Predicated region
      $region45: #{tpu_custom_call.1} parent=5 // pred_check
        _
      $region46: #{tpu_custom_call.1} parent=5 // pred_check_branch
        %304 = sbr.rel (%p301) target = $region48
      $region47: #{tpu_custom_call.1} parent=5 // pred_region
        %s305 = ssub.s32 %s20, 1
        // Predicated region
        $region49: #{tpu_custom_call.1} parent=47 // pred_check
          %p306 = pneg %p93
        $region50: #{tpu_custom_call.1} parent=47 // pred_check_branch
          %308 = sbr.rel (%p306) target = $region52
        $region51: #{tpu_custom_call.1} parent=47 // pred_region
          %309 = dma.done [#allocation3], 2048
        $region52: #{tpu_custom_call.1} parent=47 // pred_fallthru
          _
        %s310 = sand.u32 %s25, 1
        %s311 = scalar_lea.sflag [#allocation6], %s310
        %s312 = sand.u32 %s106, 1
        %s313 = smul.addr %s312, 64
        %s314 = scalar_lea.vmem [#allocation5], %s313
        // Predicated region
        $region53: #{tpu_custom_call.1} parent=47 // pred_check
          %p315 = pneg %p119
        $region54: #{tpu_custom_call.1} parent=47 // pred_check_branch
          %317 = sbr.rel (%p315) target = $region56
        $region55: #{tpu_custom_call.1} parent=47 // pred_region
          %318 = dma.done %s311, 1024
        $region56: #{tpu_custom_call.1} parent=47 // pred_fallthru
          _
        // Predicated region
        $region57: #{tpu_custom_call.1} parent=47 // pred_check
          %p319 = pneg %p140
        $region58: #{tpu_custom_call.1} parent=47 // pred_check_branch
          %321 = sbr.rel (%p319) target = $region60
        $region59: #{tpu_custom_call.1} parent=47 // pred_region
          %322 = dma.done [#allocation6], 2048
        $region60: #{tpu_custom_call.1} parent=47 // pred_fallthru
          _
        %s323 = smul.u32 16, %s25
        %p324 = scmp.lt.s32.totalorder %s323, 31
        %s325 = scalar_select %p324, %s323, 31
        %s326 = smul.addr %s325, 2
        %s327 = smul.addr %s326, 4
        %s328 = scalar_lea.vmem %s0, %s327
        %p329 = pneg %p46
        %p330 = pneg %p43
        %s331 = smul.u32 16, %s25
        %p332 = scmp.lt.s32.totalorder %s331, 31
        %s333 = scalar_select %p332, %s331, 31
        %s334 = smul.addr %s333, 8
        %s335 = scalar_lea.vmem %s1, %s334
        %p336 = pneg %p72
        %p337 = pneg %p69
        %p338 = pneg %p93
        %p339 = pneg %p90
        %s340 = sand.u32 %s25, 1
        %s341 = scalar_lea.sflag [#allocation6], %s340
        %s342 = sand.u32 %s106, 1
        %s343 = smul.addr %s342, 64
        %s344 = scalar_lea.vmem [#allocation5], %s343
        %p345 = pneg %p119
        %p346 = pneg %p116
        %p347 = pneg %p140
        %p348 = pneg %p137
        %p349 = pneg %p161
        %p350 = pneg %p158
        %p351 = pneg %p182
        %p352 = pneg %p179
        %p353 = pneg %p208
        %p354 = pneg %p205
        %s355 = sand.u32 %s195, 1
        %s356 = scalar_lea.sflag [#allocation4], %s355
        %s357 = sand.u32 %s195, 1
        %s358 = smul.addr %s357, 64
        %s359 = scalar_lea.vmem [#allocation8], %s358
        %s360 = smul.u32 16, %s25
        %p361 = scmp.lt.s32.totalorder %s360, 31
        %s362 = scalar_select %p361, %s360, 31
        %s363 = smul.addr %s362, 2
        %s364 = smul.addr %s363, 4
        %s365 = scalar_lea.vmem %s0, %s364
        %s366 = smul.u32 16, %s25
        %s367 = smul.u32 16, %s25
        %p368 = scmp.lt.s32.totalorder %s367, 31
        %s369 = scalar_select %p368, %s367, 31
        %s370 = smul.addr %s369, 8
        %s371 = scalar_lea.vmem %s1, %s370
        %s372 = smul.u32 16, %s25
        %s373 = smul.u32 16, %s25
        %s374 = smul.u32 16, %s25
        %v376 = vld [vmem:[%s365] sm:$0xff]
        %v377 = vld [vmem:[%s365 + $0x8] sm:$0xff]
        %v378 = vld [vmem:[%s365 + $0x10] sm:$0xff]
        %v379 = vld [vmem:[%s365 + $0x18] sm:$0xff]
        %v380 = vld [vmem:[%s365 + $0x20] sm:$0xff]
        %v381 = vld [vmem:[%s365 + $0x28] sm:$0xff]
        %v382 = vld [vmem:[%s365 + $0x30] sm:$0xff]
        %v383 = vld [vmem:[%s365 + $0x38] sm:$0xff]
        %v384 = vld [vmem:[%s365 + $0x40] sm:$0xff]
        %v385 = vld [vmem:[%s365 + $0x48] sm:$0xff]
        %v386 = vld [vmem:[%s365 + $0x50] sm:$0xff]
        %v387 = vld [vmem:[%s365 + $0x58] sm:$0xff]
        %v388 = vld [vmem:[%s365 + $0x60] sm:$0xff]
        %v389 = vld [vmem:[%s365 + $0x68] sm:$0xff]
        %v390 = vld [vmem:[%s365 + $0x70] sm:$0xff]
        %v391 = vld [vmem:[%s365 + $0x78] sm:$0xff]
        %v392 = vld [vmem:[#allocation2] sm:$0xf]
        %v393 = vld [vmem:[#allocation2 + $0x4] sm:$0xf]
        %v394 = vld [vmem:[#allocation2 + $0x8] sm:$0xf]
        %v395 = vld [vmem:[#allocation2 + $0xc] sm:$0xf]
        %v396 = vld [vmem:[#allocation2 + $0x10] sm:$0xf]
        %v397 = vld [vmem:[#allocation2 + $0x14] sm:$0xf]
        %v398 = vld [vmem:[#allocation2 + $0x18] sm:$0xf]
        %v399 = vld [vmem:[#allocation2 + $0x1c] sm:$0xf]
        %v400 = vld [vmem:[#allocation2 + $0x20] sm:$0xf]
        %v401 = vld [vmem:[#allocation2 + $0x24] sm:$0xf]
        %v402 = vld [vmem:[#allocation2 + $0x28] sm:$0xf]
        %v403 = vld [vmem:[#allocation2 + $0x2c] sm:$0xf]
        %v404 = vld [vmem:[#allocation2 + $0x30] sm:$0xf]
        %v405 = vld [vmem:[#allocation2 + $0x34] sm:$0xf]
        %v406 = vld [vmem:[#allocation2 + $0x38] sm:$0xf]
        %v407 = vld [vmem:[#allocation2 + $0x3c] sm:$0xf]
        %v408 = vld [vmem:[#allocation2 + $0x40] sm:$0xf]
        %v409 = vld [vmem:[#allocation2 + $0x44] sm:$0xf]
        %v410 = vld [vmem:[#allocation2 + $0x48] sm:$0xf]
        %v411 = vld [vmem:[#allocation2 + $0x4c] sm:$0xf]
        %v412 = vld [vmem:[#allocation2 + $0x50] sm:$0xf]
        %v413 = vld [vmem:[#allocation2 + $0x54] sm:$0xf]
        %v414 = vld [vmem:[#allocation2 + $0x58] sm:$0xf]
        %v415 = vld [vmem:[#allocation2 + $0x5c] sm:$0xf]
        %v416 = vld [vmem:[#allocation2 + $0x60] sm:$0xf]
        %v417 = vld [vmem:[#allocation2 + $0x64] sm:$0xf]
        %v418 = vld [vmem:[#allocation2 + $0x68] sm:$0xf]
        %v419 = vld [vmem:[#allocation2 + $0x6c] sm:$0xf]
        %v420 = vld [vmem:[#allocation2 + $0x70] sm:$0xf]
        %v421 = vld [vmem:[#allocation2 + $0x74] sm:$0xf]
        %v422 = vld [vmem:[#allocation2 + $0x78] sm:$0xf]
        %v423 = vld [vmem:[#allocation2 + $0x7c] sm:$0xf]
        %v440 = vunpack.c.l.b16 %v376
        %v441 = vunpack.c.h.b16 %v376
        %v442 = vunpack.c.l.b16 %v377
        %v443 = vunpack.c.h.b16 %v377
        %v444 = vunpack.c.l.b16 %v378
        %v445 = vunpack.c.h.b16 %v378
        %v446 = vunpack.c.l.b16 %v379
        %v447 = vunpack.c.h.b16 %v379
        %v448 = vunpack.c.l.b16 %v380
        %v449 = vunpack.c.h.b16 %v380
        %v450 = vunpack.c.l.b16 %v381
        %v451 = vunpack.c.h.b16 %v381
        %v452 = vunpack.c.l.b16 %v382
        %v453 = vunpack.c.h.b16 %v382
        %v454 = vunpack.c.l.b16 %v383
        %v455 = vunpack.c.h.b16 %v383
        %v456 = vunpack.c.l.b16 %v384
        %v457 = vunpack.c.h.b16 %v384
        %v458 = vunpack.c.l.b16 %v385
        %v459 = vunpack.c.h.b16 %v385
        %v460 = vunpack.c.l.b16 %v386
        %v461 = vunpack.c.h.b16 %v386
        %v462 = vunpack.c.l.b16 %v387
        %v463 = vunpack.c.h.b16 %v387
        %v464 = vunpack.c.l.b16 %v388
        %v465 = vunpack.c.h.b16 %v388
        %v466 = vunpack.c.l.b16 %v389
        %v467 = vunpack.c.h.b16 %v389
        %v468 = vunpack.c.l.b16 %v390
        %v469 = vunpack.c.h.b16 %v390
        %v470 = vunpack.c.l.b16 %v391
        %v471 = vunpack.c.h.b16 %v391
        %v472 = vpack.c.b16 %v442, %v440
        %v473 = vpack.c.b16 %v443, %v441
        %v474 = vpack.c.b16 %v446, %v444
        %v475 = vpack.c.b16 %v447, %v445
        %v476 = vpack.c.b16 %v450, %v448
        %v477 = vpack.c.b16 %v451, %v449
        %v478 = vpack.c.b16 %v454, %v452
        %v479 = vpack.c.b16 %v455, %v453
        %v480 = vpack.c.b16 %v458, %v456
        %v481 = vpack.c.b16 %v459, %v457
        %v482 = vpack.c.b16 %v462, %v460
        %v483 = vpack.c.b16 %v463, %v461
        %v484 = vpack.c.b16 %v466, %v464
        %v485 = vpack.c.b16 %v467, %v465
        %v486 = vpack.c.b16 %v470, %v468
        %v487 = vpack.c.b16 %v471, %v469
        %v536 = vunpack.c.l.b16 %v392
        %v537 = vunpack.c.l.b16 %v393
        %v538 = vunpack.c.l.b16 %v394
        %v539 = vunpack.c.l.b16 %v395
        %v540 = vunpack.c.l.b16 %v396
        %v541 = vunpack.c.l.b16 %v397
        %v542 = vunpack.c.l.b16 %v398
        %v543 = vunpack.c.l.b16 %v399
        %v544 = vunpack.c.l.b16 %v400
        %v545 = vunpack.c.l.b16 %v401
        %v546 = vunpack.c.l.b16 %v402
        %v547 = vunpack.c.l.b16 %v403
        %v548 = vunpack.c.l.b16 %v404
        %v549 = vunpack.c.l.b16 %v405
        %v550 = vunpack.c.l.b16 %v406
        %v551 = vunpack.c.l.b16 %v407
        %v552 = vunpack.c.l.b16 %v408
        %v553 = vunpack.c.l.b16 %v409
        %v554 = vunpack.c.l.b16 %v410
        %v555 = vunpack.c.l.b16 %v411
        %v556 = vunpack.c.l.b16 %v412
        %v557 = vunpack.c.l.b16 %v413
        %v558 = vunpack.c.l.b16 %v414
        %v559 = vunpack.c.l.b16 %v415
        %v560 = vunpack.c.l.b16 %v416
        %v561 = vunpack.c.l.b16 %v417
        %v562 = vunpack.c.l.b16 %v418
        %v563 = vunpack.c.l.b16 %v419
        %v564 = vunpack.c.l.b16 %v420
        %v565 = vunpack.c.l.b16 %v421
        %v566 = vunpack.c.l.b16 %v422
        %v567 = vunpack.c.l.b16 %v423
        %v568 = vpack.c.b16 %v537, %v536
        %v569 = vpack.c.b16 %v539, %v538
        %v570 = vpack.c.b16 %v541, %v540
        %v571 = vpack.c.b16 %v543, %v542
        %v572 = vpack.c.b16 %v545, %v544
        %v573 = vpack.c.b16 %v547, %v546
        %v574 = vpack.c.b16 %v549, %v548
        %v575 = vpack.c.b16 %v551, %v550
        %v576 = vpack.c.b16 %v553, %v552
        %v577 = vpack.c.b16 %v555, %v554
        %v578 = vpack.c.b16 %v557, %v556
        %v579 = vpack.c.b16 %v559, %v558
        %v580 = vpack.c.b16 %v561, %v560
        %v581 = vpack.c.b16 %v563, %v562
        %v582 = vpack.c.b16 %v565, %v564
        %v583 = vpack.c.b16 %v567, %v566
        %600 = vmatprep.subr.bf16.mxu0 0
        %601 = vmatpush1.bf16.msra.mxu0 %v568
        %602 = vmatprep.subr.bf16.mxu0 0
        %603 = vmatpush1.bf16.msra.mxu0 %v569
        %604 = vmatprep.subr.bf16.mxu0 0
        %605 = vmatpush1.bf16.msra.mxu0 %v570
        %606 = vmatprep.subr.bf16.mxu0 0
        %607 = vmatpush1.bf16.msra.mxu0 %v571
        %608 = vmatprep.subr.bf16.mxu0 0
        %609 = vmatpush1.bf16.msra.mxu0 %v572
        %610 = vmatprep.subr.bf16.mxu0 0
        %611 = vmatpush1.bf16.msra.mxu0 %v573
        %612 = vmatprep.subr.bf16.mxu0 0
        %613 = vmatpush1.bf16.msra.mxu0 %v574
        %614 = vmatprep.subr.bf16.mxu0 0
        %615 = vmatpush1.bf16.msra.mxu0 %v575
        %616 = vmatprep.subr.bf16.mxu0 0
        %617 = vmatpush1.bf16.msra.mxu0 %v576
        %618 = vmatprep.subr.bf16.mxu0 0
        %619 = vmatpush1.bf16.msra.mxu0 %v577
        %620 = vmatprep.subr.bf16.mxu0 0
        %621 = vmatpush1.bf16.msra.mxu0 %v578
        %622 = vmatprep.subr.bf16.mxu0 0
        %623 = vmatpush1.bf16.msra.mxu0 %v579
        %624 = vmatprep.subr.bf16.mxu0 0
        %625 = vmatpush1.bf16.msra.mxu0 %v580
        %626 = vmatprep.subr.bf16.mxu0 0
        %627 = vmatpush1.bf16.msra.mxu0 %v581
        %628 = vmatprep.subr.bf16.mxu0 0
        %629 = vmatpush1.bf16.msra.mxu0 %v582
        %630 = vmatprep.subr.bf16.mxu0 0
        %631 = vmatpush1.bf16.msra.mxu0 %v583
        %632 = vmatprep.mubr.bf16.mxu0 %v473
        %633 = vmatmul.mubr.bf16.gmra.mrb[0].mxu0 %v472
        %v634 = vpop.f32.mrb[0].mxu0
        %v635 = vadd.f32 0.0, %v634
        %v636 = vpop.f32.mrb[0].mxu0
        %v637 = vpop.f32.mrb[0].mxu0
        %v638 = vadd.f32 0.0, %v637
        %v639 = vpop.f32.mrb[0].mxu0
        %640 = vmatprep.mubr.bf16.mxu0 %v475
        %641 = vmatmul.mubr.bf16.gmra.mrb[0].mxu0 %v474
        %v642 = vpop.f32.mrb[0].mxu0
        %v643 = vadd.f32 0.0, %v642
        %v644 = vpop.f32.mrb[0].mxu0
        %v645 = vpop.f32.mrb[0].mxu0
        %v646 = vadd.f32 0.0, %v645
        %v647 = vpop.f32.mrb[0].mxu0
        %648 = vmatprep.mubr.bf16.mxu0 %v477
        %649 = vmatmul.mubr.bf16.gmra.mrb[0].mxu0 %v476
        %v650 = vpop.f32.mrb[0].mxu0
        %v651 = vadd.f32 0.0, %v650
        %v652 = vpop.f32.mrb[0].mxu0
        %v653 = vpop.f32.mrb[0].mxu0
        %v654 = vadd.f32 0.0, %v653
        %v655 = vpop.f32.mrb[0].mxu0
        %656 = vmatprep.mubr.bf16.mxu0 %v479
        %657 = vmatmul.mubr.bf16.gmra.mrb[0].mxu0 %v478
        %v658 = vpop.f32.mrb[0].mxu0
        %v659 = vadd.f32 0.0, %v658
        %v660 = vpop.f32.mrb[0].mxu0
        %v661 = vpop.f32.mrb[0].mxu0
        %v662 = vadd.f32 0.0, %v661
        %v663 = vpop.f32.mrb[0].mxu0
        %664 = vmatprep.mubr.bf16.mxu0 %v481
        %665 = vmatmul.mubr.bf16.gmra.mrb[0].mxu0 %v480
        %v666 = vpop.f32.mrb[0].mxu0
        %v667 = vadd.f32 0.0, %v666
        %v668 = vpop.f32.mrb[0].mxu0
        %v669 = vpop.f32.mrb[0].mxu0
        %v670 = vadd.f32 0.0, %v669
        %v671 = vpop.f32.mrb[0].mxu0
        %672 = vmatprep.mubr.bf16.mxu0 %v483
        %673 = vmatmul.mubr.bf16.gmra.mrb[0].mxu0 %v482
        %v674 = vpop.f32.mrb[0].mxu0
        %v675 = vadd.f32 0.0, %v674
        %v676 = vpop.f32.mrb[0].mxu0
        %v677 = vpop.f32.mrb[0].mxu0
        %v678 = vadd.f32 0.0, %v677
        %v679 = vpop.f32.mrb[0].mxu0
        %680 = vmatprep.mubr.bf16.mxu0 %v485
        %681 = vmatmul.mubr.bf16.gmra.mrb[0].mxu0 %v484
        %v682 = vpop.f32.mrb[0].mxu0
        %v683 = vadd.f32 0.0, %v682
        %v684 = vpop.f32.mrb[0].mxu0
        %v685 = vpop.f32.mrb[0].mxu0
        %v686 = vadd.f32 0.0, %v685
        %v687 = vpop.f32.mrb[0].mxu0
        %688 = vmatprep.mubr.bf16.mxu0 %v487
        %689 = vmatmul.mubr.bf16.gmra.mrb[0].mxu0 %v486
        %v690 = vpop.f32.mrb[0].mxu0
        %v691 = vadd.f32 0.0, %v690
        %v692 = vpop.f32.mrb[0].mxu0
        %v693 = vpop.f32.mrb[0].mxu0
        %v694 = vadd.f32 0.0, %v693
        %v695 = vpop.f32.mrb[0].mxu0
        %696 = vdwg.mxu0
        %v697 = vld [vmem:[%s371] sm:$0xff]
        %v698 = vld [vmem:[%s371 + $0x8] sm:$0xff]
        %v699 = vld [vmem:[%s371 + $0x10] sm:$0xff]
        %v700 = vld [vmem:[%s371 + $0x18] sm:$0xff]
        %v701 = vld [vmem:[%s371 + $0x20] sm:$0xff]
        %v702 = vld [vmem:[%s371 + $0x28] sm:$0xff]
        %v703 = vld [vmem:[%s371 + $0x30] sm:$0xff]
        %v704 = vld [vmem:[%s371 + $0x38] sm:$0xff]
        %v705 = vld [vmem:[%s371 + $0x40] sm:$0xff]
        %v706 = vld [vmem:[%s371 + $0x48] sm:$0xff]
        %v707 = vld [vmem:[%s371 + $0x50] sm:$0xff]
        %v708 = vld [vmem:[%s371 + $0x58] sm:$0xff]
        %v709 = vld [vmem:[%s371 + $0x60] sm:$0xff]
        %v710 = vld [vmem:[%s371 + $0x68] sm:$0xff]
        %v711 = vld [vmem:[%s371 + $0x70] sm:$0xff]
        %v712 = vld [vmem:[%s371 + $0x78] sm:$0xff]
        %714 = vset.pattern.permute.xlu0 0
        %715 = vperm.xlu0 %714, %v697
        %v716 = vpop.permute.xlu0 %715
        %719 = vset.pattern.permute.xlu0 0
        %720 = vperm.xlu0 %719, %v698
        %v721 = vpop.permute.xlu0 %720
        %724 = vset.pattern.permute.xlu0 0
        %725 = vperm.xlu0 %724, %v699
        %v726 = vpop.permute.xlu0 %725
        %729 = vset.pattern.permute.xlu0 0
        %730 = vperm.xlu0 %729, %v700
        %v731 = vpop.permute.xlu0 %730
        %734 = vset.pattern.permute.xlu0 0
        %735 = vperm.xlu0 %734, %v701
        %v736 = vpop.permute.xlu0 %735
        %739 = vset.pattern.permute.xlu0 0
        %740 = vperm.xlu0 %739, %v702
        %v741 = vpop.permute.xlu0 %740
        %744 = vset.pattern.permute.xlu0 0
        %745 = vperm.xlu0 %744, %v703
        %v746 = vpop.permute.xlu0 %745
        %749 = vset.pattern.permute.xlu0 0
        %750 = vperm.xlu0 %749, %v704
        %v751 = vpop.permute.xlu0 %750
        %754 = vset.pattern.permute.xlu0 0
        %755 = vperm.xlu0 %754, %v705
        %v756 = vpop.permute.xlu0 %755
        %759 = vset.pattern.permute.xlu0 0
        %760 = vperm.xlu0 %759, %v706
        %v761 = vpop.permute.xlu0 %760
        %764 = vset.pattern.permute.xlu0 0
        %765 = vperm.xlu0 %764, %v707
        %v766 = vpop.permute.xlu0 %765
        %769 = vset.pattern.permute.xlu0 0
        %770 = vperm.xlu0 %769, %v708
        %v771 = vpop.permute.xlu0 %770
        %774 = vset.pattern.permute.xlu0 0
        %775 = vperm.xlu0 %774, %v709
        %v776 = vpop.permute.xlu0 %775
        %779 = vset.pattern.permute.xlu0 0
        %780 = vperm.xlu0 %779, %v710
        %v781 = vpop.permute.xlu0 %780
        %784 = vset.pattern.permute.xlu0 0
        %785 = vperm.xlu0 %784, %v711
        %v786 = vpop.permute.xlu0 %785
        %789 = vset.pattern.permute.xlu0 0
        %790 = vperm.xlu0 %789, %v712
        %v791 = vpop.permute.xlu0 %790
        %v793 = vmul.f32 %v635, %v716
        %v794 = vmul.f32 %v638, %v721
        %v795 = vmul.f32 %v643, %v726
        %v796 = vmul.f32 %v646, %v731
        %v797 = vmul.f32 %v651, %v736
        %v798 = vmul.f32 %v654, %v741
        %v799 = vmul.f32 %v659, %v746
        %v800 = vmul.f32 %v662, %v751
        %v801 = vmul.f32 %v667, %v756
        %v802 = vmul.f32 %v670, %v761
        %v803 = vmul.f32 %v675, %v766
        %v804 = vmul.f32 %v678, %v771
        %v805 = vmul.f32 %v683, %v776
        %v806 = vmul.f32 %v686, %v781
        %v807 = vmul.f32 %v691, %v786
        %v808 = vmul.f32 %v694, %v791
        %v809 = vpack.c.bf16 %v794, %v793
        %v810 = vpack.c.bf16 %v796, %v795
        %v811 = vpack.c.bf16 %v798, %v797
        %v812 = vpack.c.bf16 %v800, %v799
        %v813 = vpack.c.bf16 %v802, %v801
        %v814 = vpack.c.bf16 %v804, %v803
        %v815 = vpack.c.bf16 %v806, %v805
        %v816 = vpack.c.bf16 %v808, %v807
        %v817 = vld [vmem:[%s314] sm:$0xf]
        %v818 = vld [vmem:[%s314 + $0x4] sm:$0xf]
        %v819 = vld [vmem:[%s314 + $0x8] sm:$0xf]
        %v820 = vld [vmem:[%s314 + $0xc] sm:$0xf]
        %v821 = vld [vmem:[%s314 + $0x10] sm:$0xf]
        %v822 = vld [vmem:[%s314 + $0x14] sm:$0xf]
        %v823 = vld [vmem:[%s314 + $0x18] sm:$0xf]
        %v824 = vld [vmem:[%s314 + $0x1c] sm:$0xf]
        %v825 = vld [vmem:[%s314 + $0x20] sm:$0xf]
        %v826 = vld [vmem:[%s314 + $0x24] sm:$0xf]
        %v827 = vld [vmem:[%s314 + $0x28] sm:$0xf]
        %v828 = vld [vmem:[%s314 + $0x2c] sm:$0xf]
        %v829 = vld [vmem:[%s314 + $0x30] sm:$0xf]
        %v830 = vld [vmem:[%s314 + $0x34] sm:$0xf]
        %v831 = vld [vmem:[%s314 + $0x38] sm:$0xf]
        %v832 = vld [vmem:[%s314 + $0x3c] sm:$0xf]
        %v849 = vunpack.c.l.b16 %v817
        %v850 = vunpack.c.l.b16 %v818
        %v851 = vunpack.c.l.b16 %v819
        %v852 = vunpack.c.l.b16 %v820
        %v853 = vunpack.c.l.b16 %v821
        %v854 = vunpack.c.l.b16 %v822
        %v855 = vunpack.c.l.b16 %v823
        %v856 = vunpack.c.l.b16 %v824
        %v857 = vunpack.c.l.b16 %v825
        %v858 = vunpack.c.l.b16 %v826
        %v859 = vunpack.c.l.b16 %v827
        %v860 = vunpack.c.l.b16 %v828
        %v861 = vunpack.c.l.b16 %v829
        %v862 = vunpack.c.l.b16 %v830
        %v863 = vunpack.c.l.b16 %v831
        %v864 = vunpack.c.l.b16 %v832
        %v865 = vpack.c.b16 %v850, %v849
        %v866 = vpack.c.b16 %v852, %v851
        %v867 = vpack.c.b16 %v854, %v853
        %v868 = vpack.c.b16 %v856, %v855
        %v869 = vpack.c.b16 %v858, %v857
        %v870 = vpack.c.b16 %v860, %v859
        %v871 = vpack.c.b16 %v862, %v861
        %v872 = vpack.c.b16 %v864, %v863
        %v881 = vld [vmem:[#allocation7] sm:$0xf]
        %v882 = vld [vmem:[#allocation7 + $0x4] sm:$0xf]
        %v883 = vld [vmem:[#allocation7 + $0x8] sm:$0xf]
        %v884 = vld [vmem:[#allocation7 + $0xc] sm:$0xf]
        %v885 = vld [vmem:[#allocation7 + $0x10] sm:$0xf]
        %v886 = vld [vmem:[#allocation7 + $0x14] sm:$0xf]
        %v887 = vld [vmem:[#allocation7 + $0x18] sm:$0xf]
        %v888 = vld [vmem:[#allocation7 + $0x1c] sm:$0xf]
        %v889 = vld [vmem:[#allocation7 + $0x20] sm:$0xf]
        %v890 = vld [vmem:[#allocation7 + $0x24] sm:$0xf]
        %v891 = vld [vmem:[#allocation7 + $0x28] sm:$0xf]
        %v892 = vld [vmem:[#allocation7 + $0x2c] sm:$0xf]
        %v893 = vld [vmem:[#allocation7 + $0x30] sm:$0xf]
        %v894 = vld [vmem:[#allocation7 + $0x34] sm:$0xf]
        %v895 = vld [vmem:[#allocation7 + $0x38] sm:$0xf]
        %v896 = vld [vmem:[#allocation7 + $0x3c] sm:$0xf]
        %v897 = vld [vmem:[#allocation7 + $0x40] sm:$0xf]
        %v898 = vld [vmem:[#allocation7 + $0x44] sm:$0xf]
        %v899 = vld [vmem:[#allocation7 + $0x48] sm:$0xf]
        %v900 = vld [vmem:[#allocation7 + $0x4c] sm:$0xf]
        %v901 = vld [vmem:[#allocation7 + $0x50] sm:$0xf]
        %v902 = vld [vmem:[#allocation7 + $0x54] sm:$0xf]
        %v903 = vld [vmem:[#allocation7 + $0x58] sm:$0xf]
        %v904 = vld [vmem:[#allocation7 + $0x5c] sm:$0xf]
        %v905 = vld [vmem:[#allocation7 + $0x60] sm:$0xf]
        %v906 = vld [vmem:[#allocation7 + $0x64] sm:$0xf]
        %v907 = vld [vmem:[#allocation7 + $0x68] sm:$0xf]
        %v908 = vld [vmem:[#allocation7 + $0x6c] sm:$0xf]
        %v909 = vld [vmem:[#allocation7 + $0x70] sm:$0xf]
        %v910 = vld [vmem:[#allocation7 + $0x74] sm:$0xf]
        %v911 = vld [vmem:[#allocation7 + $0x78] sm:$0xf]
        %v912 = vld [vmem:[#allocation7 + $0x7c] sm:$0xf]
        %v945 = vunpack.c.l.b16 %v881
        %v946 = vunpack.c.l.b16 %v882
        %v947 = vunpack.c.l.b16 %v883
        %v948 = vunpack.c.l.b16 %v884
        %v949 = vunpack.c.l.b16 %v885
        %v950 = vunpack.c.l.b16 %v886
        %v951 = vunpack.c.l.b16 %v887
        %v952 = vunpack.c.l.b16 %v888
        %v953 = vunpack.c.l.b16 %v889
        %v954 = vunpack.c.l.b16 %v890
        %v955 = vunpack.c.l.b16 %v891
        %v956 = vunpack.c.l.b16 %v892
        %v957 = vunpack.c.l.b16 %v893
        %v958 = vunpack.c.l.b16 %v894
        %v959 = vunpack.c.l.b16 %v895
        %v960 = vunpack.c.l.b16 %v896
        %v961 = vunpack.c.l.b16 %v897
        %v962 = vunpack.c.l.b16 %v898
        %v963 = vunpack.c.l.b16 %v899
        %v964 = vunpack.c.l.b16 %v900
        %v965 = vunpack.c.l.b16 %v901
        %v966 = vunpack.c.l.b16 %v902
        %v967 = vunpack.c.l.b16 %v903
        %v968 = vunpack.c.l.b16 %v904
        %v969 = vunpack.c.l.b16 %v905
        %v970 = vunpack.c.l.b16 %v906
        %v971 = vunpack.c.l.b16 %v907
        %v972 = vunpack.c.l.b16 %v908
        %v973 = vunpack.c.l.b16 %v909
        %v974 = vunpack.c.l.b16 %v910
        %v975 = vunpack.c.l.b16 %v911
        %v976 = vunpack.c.l.b16 %v912
        %v977 = vpack.c.b16 %v946, %v945
        %v978 = vpack.c.b16 %v948, %v947
        %v979 = vpack.c.b16 %v950, %v949
        %v980 = vpack.c.b16 %v952, %v951
        %v981 = vpack.c.b16 %v954, %v953
        %v982 = vpack.c.b16 %v956, %v955
        %v983 = vpack.c.b16 %v958, %v957
        %v984 = vpack.c.b16 %v960, %v959
        %v985 = vpack.c.b16 %v962, %v961
        %v986 = vpack.c.b16 %v964, %v963
        %v987 = vpack.c.b16 %v966, %v965
        %v988 = vpack.c.b16 %v968, %v967
        %v989 = vpack.c.b16 %v970, %v969
        %v990 = vpack.c.b16 %v972, %v971
        %v991 = vpack.c.b16 %v974, %v973
        %v992 = vpack.c.b16 %v976, %v975
        %1009 = vmatprep.subr.bf16.mxu0 0
        %1010 = vmatpush1.bf16.msra.mxu0 %v977
        %1011 = vmatprep.subr.bf16.mxu0 0
        %1012 = vmatpush1.bf16.msra.mxu0 %v978
        %1013 = vmatprep.subr.bf16.mxu0 0
        %1014 = vmatpush1.bf16.msra.mxu0 %v979
        %1015 = vmatprep.subr.bf16.mxu0 0
        %1016 = vmatpush1.bf16.msra.mxu0 %v980
        %1017 = vmatprep.subr.bf16.mxu0 0
        %1018 = vmatpush1.bf16.msra.mxu0 %v981
        %1019 = vmatprep.subr.bf16.mxu0 0
        %1020 = vmatpush1.bf16.msra.mxu0 %v982
        %1021 = vmatprep.subr.bf16.mxu0 0
        %1022 = vmatpush1.bf16.msra.mxu0 %v983
        %1023 = vmatprep.subr.bf16.mxu0 0
        %1024 = vmatpush1.bf16.msra.mxu0 %v984
        %1025 = vmatprep.subr.bf16.mxu0 0
        %1026 = vmatpush1.bf16.msra.mxu0 %v985
        %1027 = vmatprep.subr.bf16.mxu0 0
        %1028 = vmatpush1.bf16.msra.mxu0 %v986
        %1029 = vmatprep.subr.bf16.mxu0 0
        %1030 = vmatpush1.bf16.msra.mxu0 %v987
        %1031 = vmatprep.subr.bf16.mxu0 0
        %1032 = vmatpush1.bf16.msra.mxu0 %v988
        %1033 = vmatprep.subr.bf16.mxu0 0
        %1034 = vmatpush1.bf16.msra.mxu0 %v989
        %1035 = vmatprep.subr.bf16.mxu0 0
        %1036 = vmatpush1.bf16.msra.mxu0 %v990
        %1037 = vmatprep.subr.bf16.mxu0 0
        %1038 = vmatpush1.bf16.msra.mxu0 %v991
        %1039 = vmatprep.subr.bf16.mxu0 0
        %1040 = vmatpush1.bf16.msra.mxu0 %v992
        %1041 = vmatprep.mubr.bf16.mxu0 %v865
        %1042 = vmatmul.mubr.bf16.gmra.mrb[0].mxu0 %v809
        %v1043 = vpop.f32.mrb[0].mxu0
        %v1044 = vadd.f32 0.0, %v1043
        %v1045 = vpop.f32.mrb[0].mxu0
        %v1046 = vpop.f32.mrb[0].mxu0
        %v1047 = vadd.f32 0.0, %v1046
        %v1048 = vpop.f32.mrb[0].mxu0
        %1049 = vmatprep.mubr.bf16.mxu0 %v866
        %1050 = vmatmul.mubr.bf16.gmra.mrb[0].mxu0 %v810
        %v1051 = vpop.f32.mrb[0].mxu0
        %v1052 = vadd.f32 0.0, %v1051
        %v1053 = vpop.f32.mrb[0].mxu0
        %v1054 = vpop.f32.mrb[0].mxu0
        %v1055 = vadd.f32 0.0, %v1054
        %v1056 = vpop.f32.mrb[0].mxu0
        %1057 = vmatprep.mubr.bf16.mxu0 %v867
        %1058 = vmatmul.mubr.bf16.gmra.mrb[0].mxu0 %v811
        %v1059 = vpop.f32.mrb[0].mxu0
        %v1060 = vadd.f32 0.0, %v1059
        %v1061 = vpop.f32.mrb[0].mxu0
        %v1062 = vpop.f32.mrb[0].mxu0
        %v1063 = vadd.f32 0.0, %v1062
        %v1064 = vpop.f32.mrb[0].mxu0
        %1065 = vmatprep.mubr.bf16.mxu0 %v868
        %1066 = vmatmul.mubr.bf16.gmra.mrb[0].mxu0 %v812
        %v1067 = vpop.f32.mrb[0].mxu0
        %v1068 = vadd.f32 0.0, %v1067
        %v1069 = vpop.f32.mrb[0].mxu0
        %v1070 = vpop.f32.mrb[0].mxu0
        %v1071 = vadd.f32 0.0, %v1070
        %v1072 = vpop.f32.mrb[0].mxu0
        %1073 = vmatprep.mubr.bf16.mxu0 %v869
        %1074 = vmatmul.mubr.bf16.gmra.mrb[0].mxu0 %v813
        %v1075 = vpop.f32.mrb[0].mxu0
        %v1076 = vadd.f32 0.0, %v1075
        %v1077 = vpop.f32.mrb[0].mxu0
        %v1078 = vpop.f32.mrb[0].mxu0
        %v1079 = vadd.f32 0.0, %v1078
        %v1080 = vpop.f32.mrb[0].mxu0
        %1081 = vmatprep.mubr.bf16.mxu0 %v870
        %1082 = vmatmul.mubr.bf16.gmra.mrb[0].mxu0 %v814
        %v1083 = vpop.f32.mrb[0].mxu0
        %v1084 = vadd.f32 0.0, %v1083
        %v1085 = vpop.f32.mrb[0].mxu0
        %v1086 = vpop.f32.mrb[0].mxu0
        %v1087 = vadd.f32 0.0, %v1086
        %v1088 = vpop.f32.mrb[0].mxu0
        %1089 = vmatprep.mubr.bf16.mxu0 %v871
        %1090 = vmatmul.mubr.bf16.gmra.mrb[0].mxu0 %v815
        %v1091 = vpop.f32.mrb[0].mxu0
        %v1092 = vadd.f32 0.0, %v1091
        %v1093 = vpop.f32.mrb[0].mxu0
        %v1094 = vpop.f32.mrb[0].mxu0
        %v1095 = vadd.f32 0.0, %v1094
        %v1096 = vpop.f32.mrb[0].mxu0
        %1097 = vmatprep.mubr.bf16.mxu0 %v872
        %1098 = vmatmul.mubr.bf16.gmra.mrb[0].mxu0 %v816
        %v1099 = vpop.f32.mrb[0].mxu0
        %v1100 = vadd.f32 0.0, %v1099
        %v1101 = vpop.f32.mrb[0].mxu0
        %v1102 = vpop.f32.mrb[0].mxu0
        %v1103 = vadd.f32 0.0, %v1102
        %v1104 = vpop.f32.mrb[0].mxu0
        %1105 = vdwg.mxu0
        %v1106 = vld [vmem:[%s5] sm:$0x1]
        %v1108 = vlaneseq
        %v1109 = vshrl.u32 %v1108, 7
        %v1110 = vsub.s32 0, %v1109
        %v1111 = vrot.slane %v1106, %v1110
        %v1113 = vmul.f32 %v1044, %v1111
        %v1114 = vmul.f32 %v1047, %v1111
        %v1115 = vmul.f32 %v1052, %v1111
        %v1116 = vmul.f32 %v1055, %v1111
        %v1117 = vmul.f32 %v1060, %v1111
        %v1118 = vmul.f32 %v1063, %v1111
        %v1119 = vmul.f32 %v1068, %v1111
        %v1120 = vmul.f32 %v1071, %v1111
        %v1121 = vmul.f32 %v1076, %v1111
        %v1122 = vmul.f32 %v1079, %v1111
        %v1123 = vmul.f32 %v1084, %v1111
        %v1124 = vmul.f32 %v1087, %v1111
        %v1125 = vmul.f32 %v1092, %v1111
        %v1126 = vmul.f32 %v1095, %v1111
        %v1127 = vmul.f32 %v1100, %v1111
        %v1128 = vmul.f32 %v1103, %v1111
        %v1129 = vld [vmem:[%s6] sm:$0x1]
        %v1131 = vlaneseq
        %v1132 = vshrl.u32 %v1131, 7
        %v1133 = vsub.s32 0, %v1132
        %v1134 = vrot.slane %v1129, %v1133
        %v1136 = vadd.f32 %v1113, %v1134
        %v1137 = vadd.f32 %v1114, %v1134
        %v1138 = vadd.f32 %v1115, %v1134
        %v1139 = vadd.f32 %v1116, %v1134
        %v1140 = vadd.f32 %v1117, %v1134
        %v1141 = vadd.f32 %v1118, %v1134
        %v1142 = vadd.f32 %v1119, %v1134
        %v1143 = vadd.f32 %v1120, %v1134
        %v1144 = vadd.f32 %v1121, %v1134
        %v1145 = vadd.f32 %v1122, %v1134
        %v1146 = vadd.f32 %v1123, %v1134
        %v1147 = vadd.f32 %v1124, %v1134
        %v1148 = vadd.f32 %v1125, %v1134
        %v1149 = vadd.f32 %v1126, %v1134
        %v1150 = vadd.f32 %v1127, %v1134
        %v1151 = vadd.f32 %v1128, %v1134
        %v1152 = vmax.f32 %v1136, 0.0
        %v1153 = vmax.f32 %v1137, 0.0
        %v1154 = vmax.f32 %v1138, 0.0
        %v1155 = vmax.f32 %v1139, 0.0
        %v1156 = vmax.f32 %v1140, 0.0
        %v1157 = vmax.f32 %v1141, 0.0
        %v1158 = vmax.f32 %v1142, 0.0
        %v1159 = vmax.f32 %v1143, 0.0
        %v1160 = vmax.f32 %v1144, 0.0
        %v1161 = vmax.f32 %v1145, 0.0
        %v1162 = vmax.f32 %v1146, 0.0
        %v1163 = vmax.f32 %v1147, 0.0
        %v1164 = vmax.f32 %v1148, 0.0
        %v1165 = vmax.f32 %v1149, 0.0
        %v1166 = vmax.f32 %v1150, 0.0
        %v1167 = vmax.f32 %v1151, 0.0
        %v1168 = vpack.c.bf16 %v1153, %v1152
        %v1169 = vpack.c.bf16 %v1155, %v1154
        %v1170 = vpack.c.bf16 %v1157, %v1156
        %v1171 = vpack.c.bf16 %v1159, %v1158
        %v1172 = vpack.c.bf16 %v1161, %v1160
        %v1173 = vpack.c.bf16 %v1163, %v1162
        %v1174 = vpack.c.bf16 %v1165, %v1164
        %v1175 = vpack.c.bf16 %v1167, %v1166
        %v1184 = vunpack.c.l.b16 %v1168
        %v1185 = vunpack.c.h.b16 %v1168
        %v1186 = vunpack.c.l.b16 %v1169
        %v1187 = vunpack.c.h.b16 %v1169
        %v1188 = vunpack.c.l.b16 %v1170
        %v1189 = vunpack.c.h.b16 %v1170
        %v1190 = vunpack.c.l.b16 %v1171
        %v1191 = vunpack.c.h.b16 %v1171
        %v1192 = vunpack.c.l.b16 %v1172
        %v1193 = vunpack.c.h.b16 %v1172
        %v1194 = vunpack.c.l.b16 %v1173
        %v1195 = vunpack.c.h.b16 %v1173
        %v1196 = vunpack.c.l.b16 %v1174
        %v1197 = vunpack.c.h.b16 %v1174
        %v1198 = vunpack.c.l.b16 %v1175
        %v1199 = vunpack.c.h.b16 %v1175
        %v1200 = vpack.c.b16 %v1184, %v1184
        %v1201 = vpack.c.b16 %v1185, %v1185
        %v1202 = vpack.c.b16 %v1186, %v1186
        %v1203 = vpack.c.b16 %v1187, %v1187
        %v1204 = vpack.c.b16 %v1188, %v1188
        %v1205 = vpack.c.b16 %v1189, %v1189
        %v1206 = vpack.c.b16 %v1190, %v1190
        %v1207 = vpack.c.b16 %v1191, %v1191
        %v1208 = vpack.c.b16 %v1192, %v1192
        %v1209 = vpack.c.b16 %v1193, %v1193
        %v1210 = vpack.c.b16 %v1194, %v1194
        %v1211 = vpack.c.b16 %v1195, %v1195
        %v1212 = vpack.c.b16 %v1196, %v1196
        %v1213 = vpack.c.b16 %v1197, %v1197
        %v1214 = vpack.c.b16 %v1198, %v1198
        %v1215 = vpack.c.b16 %v1199, %v1199
        %1232 = vst [vmem:[%s359] sm:$0xf] %v1200
        %1233 = vst [vmem:[%s359 + $0x4] sm:$0xf] %v1201
        %1234 = vst [vmem:[%s359 + $0x8] sm:$0xf] %v1202
        %1235 = vst [vmem:[%s359 + $0xc] sm:$0xf] %v1203
        %1236 = vst [vmem:[%s359 + $0x10] sm:$0xf] %v1204
        %1237 = vst [vmem:[%s359 + $0x14] sm:$0xf] %v1205
        %1238 = vst [vmem:[%s359 + $0x18] sm:$0xf] %v1206
        %1239 = vst [vmem:[%s359 + $0x1c] sm:$0xf] %v1207
        %1240 = vst [vmem:[%s359 + $0x20] sm:$0xf] %v1208
        %1241 = vst [vmem:[%s359 + $0x24] sm:$0xf] %v1209
        %1242 = vst [vmem:[%s359 + $0x28] sm:$0xf] %v1210
        %1243 = vst [vmem:[%s359 + $0x2c] sm:$0xf] %v1211
        %1244 = vst [vmem:[%s359 + $0x30] sm:$0xf] %v1212
        %1245 = vst [vmem:[%s359 + $0x34] sm:$0xf] %v1213
        %1246 = vst [vmem:[%s359 + $0x38] sm:$0xf] %v1214
        %1247 = vst [vmem:[%s359 + $0x3c] sm:$0xf] %v1215
        %s1248 = sand.u32 %s195, 1
        %s1249 = scalar_lea.sflag [#allocation4], %s1248
        %s1250 = sand.u32 %s195, 1
        %s1251 = smul.addr %s1250, 64
        %s1252 = scalar_lea.vmem [#allocation8], %s1251
        // Predicated region
        $region61: #{tpu_custom_call.1} parent=47 // pred_check
          %p1253 = pneg %p205
        $region62: #{tpu_custom_call.1} parent=47 // pred_check_branch
          %1255 = sbr.rel (%p1253) target = $region64
        $region63: #{tpu_custom_call.1} parent=47 // pred_region
          %s1256 = smul.u32 16, %s25
          %s1258 = ssub.s32 1024, 1024
          %1259 = vsyncadd %s1249, %s1258
          %s1260 = smul.addr %s1256, 64
          %s1261 = scalar_lea.hbm %s7, %s1260
          %s1262 = sshll.u32 %s1252, 4
          %s1263 = int_to_ptr.vmem [resolvable:$true] %s1262
          %1268 = dma.vmem_to_hbm [thread:$0]  %s1263, 1024, %s1261, %s1249, 64, 64, 4
        $region64: #{tpu_custom_call.1} parent=47 // pred_fallthru
          _
      $region48: #{tpu_custom_call.1} parent=5 // pred_fallthru
        _
      %p1269 = scmp.le.s32.totalorder 2, %s20
      // Predicated region
      $region65: #{tpu_custom_call.1} parent=5 // pred_check
        %p1270 = pneg %p1269
      $region66: #{tpu_custom_call.1} parent=5 // pred_check_branch
        %1272 = sbr.rel (%p1270) target = $region68
      $region67: #{tpu_custom_call.1} parent=5 // pred_region
        %s1273 = ssub.s32 %s20, 2
        // Predicated region
        $region69: #{tpu_custom_call.1} parent=67 // pred_check
          %p1274 = pneg %p211
        $region70: #{tpu_custom_call.1} parent=67 // pred_check_branch
          %1276 = sbr.rel (%p1274) target = $region72
        $region71: #{tpu_custom_call.1} parent=67 // pred_region
          %s1277 = sand.u32 %s196, 1
          %s1278 = scalar_lea.sflag [#allocation4], %s1277
          %s1279 = sand.u32 %s196, 1
          %s1280 = smul.addr %s1279, 64
          %s1281 = scalar_lea.vmem [#allocation8], %s1280
          %1282 = dma.done %s1278, 1024
        $region72: #{tpu_custom_call.1} parent=67 // pred_fallthru
          _
      $region68: #{tpu_custom_call.1} parent=5 // pred_fallthru
        _
    $region6: #{tpu_custom_call.1} parent=1 // loop_footer
      %s24 = sadd.s32 1, %s20
    $region7: #{tpu_custom_call.1} parent=1 // loop_footer_branch
      %19 = sbr.rel target = $region3
    $region8: #{tpu_custom_call.1} parent=1 // loop_exit
      _
    %1283 = vsyncpa [#allocation3], 1
    %s1284 = scalar_lea.sflag [#allocation3], 1
    %1285 = vsyncpa %s1284, 1
    %1286 = vsyncpa [#allocation6], 1
    %s1287 = scalar_lea.sflag [#allocation6], 1
    %1288 = vsyncpa %s1287, 1
    %1289 = vsyncpa [#allocation4], 1
    %s1290 = scalar_lea.sflag [#allocation4], 1
    %1291 = vsyncpa %s1290, 1

</llo_original>
